<compile_context>
chip_gen: v7x
topology: tpu7x:2x2x1
jax: 0.10.0
libtpu: 0.0.40
codegen_flags: <defaults>
</compile_context>

<pallas_src>
import math
import functools

import jax
import jax.numpy as jnp
from jax.experimental import pallas as pl
from jax.experimental.pallas import tpu as pltpu


# ---------------------------------------------------------------------------
# helpers
# ---------------------------------------------------------------------------
def _round_up(v, m):
    return (v + m - 1) // m * m


def _pick_tile(extent_p, candidates):
    for c in candidates:
        if extent_p % c == 0:
            return c
    return extent_p  # unreachable: extent_p is a multiple of 128 and 128 is a candidate


def _reparam_f32(mu_ref, sig_ref, eps_ref):
    """w = mu + sigma * eps, computed in fp32 regardless of the stream dtype."""
    return (mu_ref[...].astype(jnp.float32)
            + sig_ref[...].astype(jnp.float32) * eps_ref[...].astype(jnp.float32))


def _nt_dot(x_tile, w_tile):
    """x (tm, tk) . w (tn, tk) contracted over In -> (tm, tn); no in-kernel transpose."""
    return jax.lax.dot_general(
        x_tile, w_tile,
        dimension_numbers=(((1,), (1,)), ((), ())),
        preferred_element_type=jnp.float32)


# ---------------------------------------------------------------------------
# kernels
# ---------------------------------------------------------------------------
def _reparam_kernel(wmu_ref, wsig_ref, weps_ref, w_ref):
    """Materialize w = mu + sigma*eps (elementwise, run exactly once per forward)."""
    w_ref[...] = _reparam_f32(wmu_ref, wsig_ref, weps_ref).astype(w_ref.dtype)


def _make_fused_kernel(nk):
    """y = x @ (mu + sigma*eps).T + bias, reduction tiled over the In axis."""
    if nk == 1:
        # Single reduction step: skip the VMEM accumulator entirely.
        def kernel(x_ref, wmu_ref, wsig_ref, weps_ref, bias_ref, o_ref):
            w = _reparam_f32(wmu_ref, wsig_ref, weps_ref).astype(x_ref.dtype)
            part = _nt_dot(x_ref[...], w)
            o_ref[...] = (part + bias_ref[...].astype(jnp.float32)).astype(o_ref.dtype)
        return kernel

    def kernel(x_ref, wmu_ref, wsig_ref, weps_ref, bias_ref, o_ref, acc_ref):
        k = pl.program_id(2)
        w = _reparam_f32(wmu_ref, wsig_ref, weps_ref).astype(x_ref.dtype)
        part = _nt_dot(x_ref[...], w)

        @pl.when(k == 0)
        def _():                      # direct write: no separate zero-init pass
            acc_ref[...] = part

        @pl.when(k > 0)
        def _():
            acc_ref[...] += part

        @pl.when(k == nk - 1)
        def _():
            o_ref[...] = (acc_ref[...] + bias_ref[...].astype(jnp.float32)).astype(o_ref.dtype)

    return kernel


def _make_matmul_kernel(nk):
    """Plain tiled matmul with bias epilogue: y = x @ w.T + bias (w pre-materialized)."""
    if nk == 1:
        def kernel(x_ref, w_ref, bias_ref, o_ref):
            part = _nt_dot(x_ref[...], w_ref[...])
            o_ref[...] = (part + bias_ref[...].astype(jnp.float32)).astype(o_ref.dtype)
        return kernel

    def kernel(x_ref, w_ref, bias_ref, o_ref, acc_ref):
        k = pl.program_id(2)
        part = _nt_dot(x_ref[...], w_ref[...])

        @pl.when(k == 0)
        def _():
            acc_ref[...] = part

        @pl.when(k > 0)
        def _():
            acc_ref[...] += part

        @pl.when(k == nk - 1)
        def _():
            o_ref[...] = (acc_ref[...] + bias_ref[...].astype(jnp.float32)).astype(o_ref.dtype)

    return kernel


# ---------------------------------------------------------------------------
# wrappers
# ---------------------------------------------------------------------------
def sample_eps(key, out_features, in_features):
    """One standard-normal draw per weight / bias element (== torch.randn_like)."""
    k_w, k_b = jax.random.split(key)
    weight_eps = jax.random.normal(k_w, (out_features, in_features), jnp.float32)
    bias_eps = jax.random.normal(k_b, (out_features,), jnp.float32)
    return weight_eps, bias_eps


def bayes_linear_forward(x, weight_mu, weight_sigma, bias_mu, bias_sigma, key,
                         *, compute_dtype=None, materialize_weight=None):
    """BayesLinear forward.  x: (B, In); weight_*: (Out, In); bias_*: (Out,) or None.

    compute_dtype: dtype fed to the MXU / used to stream the weights (set jnp.bfloat16
      on v6e/v7x when tolerance allows; accumulation is always fp32).
    materialize_weight: None = auto (materialize when the batch needs >2 weight passes).
    """
    B, In = x.shape
    Out, In2 = weight_mu.shape
    assert In2 == In
    out_dtype = x.dtype
    if compute_dtype is None:
        compute_dtype = x.dtype

    # --- noise + bias (O(Out*In) draw, O(Out) bias math: done outside the kernel) ----
    weight_eps, bias_eps = sample_eps(key, Out, In)
    if bias_mu is not None and bias_sigma is not None:
        bias = bias_mu.astype(jnp.float32) + bias_sigma.astype(jnp.float32) * bias_eps
    else:
        bias = jnp.zeros((Out,), jnp.float32)

    # --- lane-dense tiling -----------------------------------------------------------
    in_p = _round_up(In, 128)
    out_p = _round_up(Out, 128)
    tk = _pick_tile(in_p, (512, 384, 256, 128))
    # prefer tn=256 only when it still leaves >=2 output tiles (keeps both v7x cores fed)
    tn = 256 if (out_p % 256 == 0 and out_p // 256 >= 2) else 128
    tm = min(256, _round_up(B, 8))
    b_p = _round_up(B, tm)
    nk = in_p // tk
    n_batch_tiles = b_p // tm

    if materialize_weight is None:
        materialize_weight = n_batch_tiles > 2

    def pad2(a, rows, cols):
        if a.shape == (rows, cols):
            return a
        return jnp.pad(a, ((0, rows - a.shape[0]), (0, cols - a.shape[1])))

    xp = pad2(x.astype(compute_dtype), b_p, in_p)
    wmu = pad2(weight_mu.astype(compute_dtype), out_p, in_p)
    wsig = pad2(weight_sigma.astype(compute_dtype), out_p, in_p)
    weps = pad2(weight_eps.astype(compute_dtype), out_p, in_p)
    bias_p = pad2(bias.reshape(1, Out), 1, out_p)

    grid = (b_p // tm, out_p // tn, nk)
    mm_scratch = [] if nk == 1 else [pltpu.VMEM((tm, tn), jnp.float32)]
    mm_params = pltpu.CompilerParams(
        dimension_semantics=("parallel", "parallel", "arbitrary"))

    x_spec = pl.BlockSpec((tm, tk), lambda i, j, k: (i, k))
    w_spec = pl.BlockSpec((tn, tk), lambda i, j, k: (j, k))
    b_spec = pl.BlockSpec((1, tn), lambda i, j, k: (0, j))
    o_spec = pl.BlockSpec((tm, tn), lambda i, j, k: (i, j))

    if not materialize_weight:
        # Fused path: reparameterize each weight tile on the fly and feed the MXU.
        out = pl.pallas_call(
            _make_fused_kernel(nk),
            out_shape=jax.ShapeDtypeStruct((b_p, out_p), out_dtype),
            grid_spec=pltpu.PrefetchScalarGridSpec(
                num_scalar_prefetch=0,
                grid=grid,
                in_specs=[x_spec, w_spec, w_spec, w_spec, b_spec],
                out_specs=o_spec,
                scratch_shapes=mm_scratch,
            ),
            compiler_params=mm_params,
        )(xp, wmu, wsig, weps, bias_p)
    else:
        # Stage 1: materialize w once (reparameterization runs exactly once, and the
        # matmul below streams 1 weight-sized array per batch pass instead of 3).
        w = pl.pallas_call(
            _reparam_kernel,
            out_shape=jax.ShapeDtypeStruct((out_p, in_p), compute_dtype),
            grid_spec=pltpu.PrefetchScalarGridSpec(
                num_scalar_prefetch=0,
                grid=(out_p // tn, in_p // tk),
                in_specs=[pl.BlockSpec((tn, tk), lambda j, k: (j, k))] * 3,
                out_specs=pl.BlockSpec((tn, tk), lambda j, k: (j, k)),
            ),
            compiler_params=pltpu.CompilerParams(
                dimension_semantics=("parallel", "parallel")),
        )(wmu, wsig, weps)

        # Stage 2: plain tiled matmul + bias.
        out = pl.pallas_call(
            _make_matmul_kernel(nk),
            out_shape=jax.ShapeDtypeStruct((b_p, out_p), out_dtype),
            grid_spec=pltpu.PrefetchScalarGridSpec(
                num_scalar_prefetch=0,
                grid=grid,
                in_specs=[x_spec, w_spec, b_spec],
                out_specs=o_spec,
                scratch_shapes=mm_scratch,
            ),
            compiler_params=mm_params,
        )(xp, w, bias_p)

    return out[:B, :Out]


def xavier_uniform(key, shape, gain):
    # Matches nn.init.xavier_uniform_ for a (fan_out, fan_in) weight.
    fan_out, fan_in = shape
    a = gain * math.sqrt(6.0 / (fan_in + fan_out))
    return jax.random.uniform(key, shape, jnp.float32, minval=-a, maxval=a)


# ---------------------------------------------------------------------------
# test
# ---------------------------------------------------------------------------
if __name__ == "__main__":
    # Small shapes that still exercise padding, the K-reduction grid (nk=5),
    # multiple output tiles, and both execution paths.
    batch, in_features, out_features = 20, 600, 380

    root = jax.random.PRNGKey(0)
    k_x, k_wmu, k_wsig, k_bmu, k_bsig, k_noise = jax.random.split(root, 6)

    weight_mu = xavier_uniform(k_wmu, (out_features, in_features), gain=0.1)
    weight_sigma = xavier_uniform(k_wsig, (out_features, in_features), gain=0.1)
    bias_mu = 1e-5 * jax.random.normal(k_bmu, (out_features,), jnp.float32)
    bias_sigma = 1e-4 * jax.random.normal(k_bsig, (out_features,), jnp.float32)
    x = jax.random.normal(k_x, (batch, in_features), jnp.float32)

    # fused (auto-dispatched for a single batch pass) and forced two-stage path
    y_fused = jax.block_until_ready(bayes_linear_forward(
        x, weight_mu, weight_sigma, bias_mu, bias_sigma, k_noise))
    y_twostage = jax.block_until_ready(bayes_linear_forward(
        x, weight_mu, weight_sigma, bias_mu, bias_sigma, k_noise,
        materialize_weight=True))

    # Pure-JAX reference using the same (deterministic) noise draws.
    weight_eps, bias_eps = sample_eps(k_noise, out_features, in_features)
    w_ref = weight_mu + weight_sigma * weight_eps
    b_ref = bias_mu + bias_sigma * bias_eps
    y_ref = jnp.dot(x, w_ref.T, precision=jax.lax.Precision.HIGHEST) + b_ref

    scale = float(jnp.max(jnp.abs(y_ref))) + 1e-6
    for name, y in (("fused", y_fused), ("two-stage", y_twostage)):
        assert y.shape == (batch, out_features), (name, y.shape)
        assert bool(jnp.all(jnp.isfinite(y))), name
        err = float(jnp.max(jnp.abs(y - y_ref)))
        # tolerance accounts for TPU MXU default-precision fp32 matmul
        assert err / scale < 2e-2, f"{name} mismatch vs reference: max abs err {err}"

    print("KERNEL_OK")
</pallas_src>

<mosaic_0001>
module attributes {stable_mosaic.version = 11 : i64} {
  func.func @kernel(%arg0: i32, %arg1: i32, %arg2: i32, %arg3: memref<24x128xf32, #tpu.memory_space<vmem>>, %arg4: memref<128x128xf32, #tpu.memory_space<vmem>>, %arg5: memref<128x128xf32, #tpu.memory_space<vmem>>, %arg6: memref<128x128xf32, #tpu.memory_space<vmem>>, %arg7: memref<1x128xf32, #tpu.memory_space<vmem>>, %arg8: memref<24x128xf32, #tpu.memory_space<vmem>>, %arg9: memref<24x128xf32, #tpu.memory_space<vmem>>) attributes {dimension_semantics = [#tpu.dimension_semantics<parallel>, #tpu.dimension_semantics<parallel>, #tpu.dimension_semantics<arbitrary>], iteration_bounds = array<i64: 1, 3, 5>, scalar_prefetch = 0 : i64, scratch_operands = 1 : i64, tpu.core_type = #tpu.core_type<tc>, window_params = [{transform_indices = @transform_0, window_bounds = array<i64: 24, 128>}, {transform_indices = @transform_1, window_bounds = array<i64: 128, 128>}, {transform_indices = @transform_2, window_bounds = array<i64: 128, 128>}, {transform_indices = @transform_3, window_bounds = array<i64: 128, 128>}, {transform_indices = @transform_4, window_bounds = array<i64: 1, 128>}, {transform_indices = @transform_5, window_bounds = array<i64: 24, 128>}]} {
    %c0 = arith.constant 0 : index
    %c0_0 = arith.constant 0 : index
    %0 = vector.load %arg4[%c0, %c0_0] : memref<128x128xf32, #tpu.memory_space<vmem>>, vector<128x128xf32>
    %c0_1 = arith.constant 0 : index
    %c0_2 = arith.constant 0 : index
    %1 = vector.load %arg5[%c0_1, %c0_2] : memref<128x128xf32, #tpu.memory_space<vmem>>, vector<128x128xf32>
    %c0_3 = arith.constant 0 : index
    %c0_4 = arith.constant 0 : index
    %2 = vector.load %arg6[%c0_3, %c0_4] : memref<128x128xf32, #tpu.memory_space<vmem>>, vector<128x128xf32>
    %3 = arith.mulf %1, %2 : vector<128x128xf32>
    %4 = arith.addf %0, %3 : vector<128x128xf32>
    %c0_5 = arith.constant 0 : index
    %c0_6 = arith.constant 0 : index
    %5 = vector.load %arg3[%c0_5, %c0_6] : memref<24x128xf32, #tpu.memory_space<vmem>>, vector<24x128xf32>
    %cst = arith.constant dense<0.000000e+00> : vector<24x128xf32>
    %6 = tpu.matmul %5, %4, %cst {dimension_numbers = #tpu.dot_dimension_numbers<[1], [1], [0], [0], [0, 0, 1, 0], [], []>} : vector<24x128xf32>, vector<128x128xf32>, vector<24x128xf32> -> vector<24x128xf32>
    %c0_i32 = arith.constant 0 : i32
    %7 = arith.cmpi eq, %arg2, %c0_i32 : i32
    %8 = arith.extui %7 : i1 to i32
    %c0_i32_7 = arith.constant 0 : i32
    %9 = arith.cmpi ne, %8, %c0_i32_7 : i32
    scf.if %9 {
      %c0_11 = arith.constant 0 : index
      %c0_12 = arith.constant 0 : index
      %16 = vector.load %arg9[%c0_11, %c0_12] : memref<24x128xf32, #tpu.memory_space<vmem>>, vector<24x128xf32>
      tpu.vector_store %arg9[%c0_11, %c0_12], %6 {strides = array<i32>} : memref<24x128xf32, #tpu.memory_space<vmem>>, vector<24x128xf32>,
    } else {
    }
    %c0_i32_8 = arith.constant 0 : i32
    %10 = arith.cmpi sgt, %arg2, %c0_i32_8 : i32
    %11 = arith.extui %10 : i1 to i32
    %c0_i32_9 = arith.constant 0 : i32
    %12 = arith.cmpi ne, %11, %c0_i32_9 : i32
    scf.if %12 {
      %c0_11 = arith.constant 0 : index
      %c0_12 = arith.constant 0 : index
      %16 = vector.load %arg9[%c0_11, %c0_12] : memref<24x128xf32, #tpu.memory_space<vmem>>, vector<24x128xf32>
      %17 = arith.addf %16, %6 : vector<24x128xf32>
      %c0_13 = arith.constant 0 : index
      %c0_14 = arith.constant 0 : index
      %18 = vector.load %arg9[%c0_13, %c0_14] : memref<24x128xf32, #tpu.memory_space<vmem>>, vector<24x128xf32>
      tpu.vector_store %arg9[%c0_13, %c0_14], %17 {strides = array<i32>} : memref<24x128xf32, #tpu.memory_space<vmem>>, vector<24x128xf32>,
    } else {
    }
    %c4_i32 = arith.constant 4 : i32
    %13 = arith.cmpi eq, %arg2, %c4_i32 : i32
    %14 = arith.extui %13 : i1 to i32
    %c0_i32_10 = arith.constant 0 : i32
    %15 = arith.cmpi ne, %14, %c0_i32_10 : i32
    scf.if %15 {
      %c0_11 = arith.constant 0 : index
      %c0_12 = arith.constant 0 : index
      %16 = vector.load %arg9[%c0_11, %c0_12] : memref<24x128xf32, #tpu.memory_space<vmem>>, vector<24x128xf32>
      %c0_13 = arith.constant 0 : index
      %c0_14 = arith.constant 0 : index
      %17 = vector.load %arg7[%c0_13, %c0_14] : memref<1x128xf32, #tpu.memory_space<vmem>>, vector<1x128xf32>
      %18 = vector.broadcast %17 : vector<1x128xf32> to vector<24x128xf32>
      %19 = arith.addf %16, %18 : vector<24x128xf32>
      %c0_15 = arith.constant 0 : index
      %c0_16 = arith.constant 0 : index
      %20 = vector.load %arg8[%c0_15, %c0_16] : memref<24x128xf32, #tpu.memory_space<vmem>>, vector<24x128xf32>
      tpu.vector_store %arg8[%c0_15, %c0_16], %19 {strides = array<i32>} : memref<24x128xf32, #tpu.memory_space<vmem>>, vector<24x128xf32>,
    } else {
    }
    return
  }
  func.func @transform_0(%arg0: i32, %arg1: i32, %arg2: i32) -> (i32, i32) {
    %c0_i32 = arith.constant 0 : i32
    return %arg0, %arg2 : i32, i32
  }
  func.func @transform_1(%arg0: i32, %arg1: i32, %arg2: i32) -> (i32, i32) {
    %c0_i32 = arith.constant 0 : i32
    return %arg1, %arg2 : i32, i32
  }
  func.func @transform_2(%arg0: i32, %arg1: i32, %arg2: i32) -> (i32, i32) {
    %c0_i32 = arith.constant 0 : i32
    return %arg1, %arg2 : i32, i32
  }
  func.func @transform_3(%arg0: i32, %arg1: i32, %arg2: i32) -> (i32, i32) {
    %c0_i32 = arith.constant 0 : i32
    return %arg1, %arg2 : i32, i32
  }
  func.func @transform_4(%arg0: i32, %arg1: i32, %arg2: i32) -> (i32, i32) {
    %c0_i32 = arith.constant 0 : i32
    %c0_i32_0 = arith.constant 0 : i32
    return %c0_i32, %arg1 : i32, i32
  }
  func.func @transform_5(%arg0: i32, %arg1: i32, %arg2: i32) -> (i32, i32) {
    %c0_i32 = arith.constant 0 : i32
    return %arg0, %arg1 : i32, i32
  }
}

</mosaic_0001>

<llo_original>
// kernel: tpu_custom_call.1
$region0: #{tpu_custom_call.1}
  #allocation0 [shape = 'u32[]', space=smem, size = 0x4, offset = 0x4, fixed_abs, tag = 'smem constant byte address 0x4 - core index']
  #allocation1 [shape = 'u32[144,128]{1,0:T(1,128)}', space=vmem, size = 0x12000, scoped, tag = 'internal scratch']
  #allocation2 [shape = 'f32[24,128]{1,0:T(8,128)}', space=vmem, size = 0x3000, scoped, tag = 'scratch operand']
  %s0 = inlined_call_operand.hbm [shape: f32[24,640], index: 0, kind: input, shape index: {}]
  %s1 = inlined_call_operand.hbm [shape: f32[384,640], index: 1, kind: input, shape index: {}]
  %s2 = inlined_call_operand.hbm [shape: f32[384,640], index: 2, kind: input, shape index: {}]
  %s3 = inlined_call_operand.hbm [shape: f32[384,640], index: 3, kind: input, shape index: {}]
  %s4 = inlined_call_operand.vmem [shape: f32[1,384], index: 4, kind: input, shape index: {}]
  %s5 = inlined_call_operand.hbm [shape: f32[24,384], index: 5, kind: output, shape index: {}]
  %s6 = sld [smem:[#allocation0]]
  $region81: #{tpu_custom_call.1} parent=0
    _
  %s8 = ssub.s32 1, %s6
  %s9 = scalar_select 0, %s8, %s6
  $region1: #{tpu_custom_call.1} parent=0
    #allocation3 [shape = 'u8[24576]{0}', space=vmem, size = 0x6000, scoped, tag = 'input window, operand 0']
    #allocation4 [shape = 's32[2]{0}', space=sflag, size = 0x8, scoped, tag = 'scoped memory for tpu_custom_call.1']
    #allocation5 [shape = 's32[2]{0}', space=sflag, size = 0x8, scoped, tag = 'scoped memory for tpu_custom_call.1']
    #allocation6 [shape = 'u8[131072]{0}', space=vmem, size = 0x20000, scoped, tag = 'input window, operand 1']
    #allocation7 [shape = 's32[2]{0}', space=sflag, size = 0x8, scoped, tag = 'scoped memory for tpu_custom_call.1']
    #allocation8 [shape = 'u8[131072]{0}', space=vmem, size = 0x20000, scoped, tag = 'input window, operand 2']
    #allocation9 [shape = 'u8[131072]{0}', space=vmem, size = 0x20000, scoped, tag = 'input window, operand 3']
    #allocation10 [shape = 's32[2]{0}', space=sflag, size = 0x8, scoped, tag = 'scoped memory for tpu_custom_call.1']
    #allocation11 [shape = 'u8[24576]{0}', space=vmem, size = 0x6000, scoped, tag = 'output window, operand 0']
    %10 = vsyncpa [#allocation4], 0
    %s11 = scalar_lea.sflag [#allocation4], 1
    %12 = vsyncpa %s11, 0
    %13 = vsyncpa [#allocation7], 0
    %s14 = scalar_lea.sflag [#allocation7], 1
    %15 = vsyncpa %s14, 0
    %16 = vsyncpa [#allocation10], 0
    %s17 = scalar_lea.sflag [#allocation10], 1
    %18 = vsyncpa %s17, 0
    %19 = vsyncpa [#allocation5], 0
    %s20 = scalar_lea.sflag [#allocation5], 1
    %21 = vsyncpa %s20, 0
    loop: start=0, step=1, limit=17
    $region2: #{tpu_custom_call.1} parent=1 // loop_pre_header
      _
    $region3: #{tpu_custom_call.1} parent=1 // loop_header
      %s23 = sphi 0, %s27
      %p24 = scmp.ge.s32.totalorder %s23, 17
      %s30 = sphi 0, %s49
      %s31 = sphi 0, %s45
      %s32 = sphi 0, %s41
      %s33 = sphi 0, %s30
      %s34 = sphi 0, %s31
      %s35 = sphi 0, %s32
      %s36 = sphi 0, %s33
      %s37 = sphi 0, %s34
      %s38 = sphi 0, %s35
      %s54 = sphi 0, %s56
      %s57 = sphi 0, %s54
      %s58 = sphi 0, %s57
      %s74 = sphi 0, %s58
      %s82 = sphi 0, %s84
      %s85 = sphi 0, %s82
      %s86 = sphi 0, %s85
      %s102 = sphi 0, %s86
      %s110 = sphi 0, %s112
      %s113 = sphi 0, %s110
      %s114 = sphi 0, %s113
      %s130 = sphi 0, %s114
      %s138 = sphi 0, %s140
      %s141 = sphi 0, %s138
      %s142 = sphi 0, %s141
      %s158 = sphi 0, %s142
      %s164 = sphi 0, %s166
      %s167 = sphi 0, %s164
      %s168 = sphi 0, %s167
      %s184 = sphi 0, %s168
      %s192 = sphi 0, %s194
      %s195 = sphi 0, %s192
      %s196 = sphi 0, %s195
      %s212 = sphi 0, %s196
    $region4: #{tpu_custom_call.1} parent=1 // loop_header_branch
      %26 = sbr.rel (%p24) target = $region8
    $region5: #{tpu_custom_call.1} parent=1 // loop_body
      %s28 = ssub.s32 %s23, 1
      %s29 = ssub.s32 %s23, 2
      %s39 = sadd.s32 1, %s32
      %p40 = scmp.ge.s32.totalorder %s39, 5
      %s41 = scalar_select %p40, 0, %s39
      %s42 = sadd.s32 1, %s31
      %s43 = scalar_select %p40, %s42, %s31
      %p44 = scmp.ge.s32.totalorder %s43, 3
      %s45 = scalar_select %p44, 0, %s43
      %s46 = sadd.s32 1, %s30
      %s47 = scalar_select %p44, %s46, %s30
      %p48 = scmp.ge.s32.totalorder %s47, 1
      %s49 = scalar_select %p48, 0, %s47
      %s50 = ssub.s32 %s30, %s49
      %s51 = ssub.s32 %s32, %s41
      %s52 = sor.u32 %s50, %s51
      %p53 = scmp.eq.s32.totalorder %s52, 0
      %s55 = sadd.s32 %s54, 1
      %s56 = scalar_select %p53, %s54, %s55
      %p59 = pneg %p53
      %p60 = scmp.eq.s32.totalorder %s23, 14
      %p61 = por %p59, %p60
      %p62 = scmp.ne.s32.totalorder %s54, %s57
      %p63 = scmp.eq.s32.totalorder %s23, 0
      %p64 = por %p62, %p63
      %p65 = scmp.ne.s32.totalorder %s54, %s57
      %p66 = scmp.eq.s32.totalorder %s28, 14
      %p67 = por %p65, %p66
      %p68 = scmp.ne.s32.totalorder %s57, %s58
      %p69 = scmp.eq.s32.totalorder %s28, 0
      %p70 = por %p68, %p69
      %p71 = scmp.ne.s32.totalorder %s57, %s58
      %p72 = scmp.eq.s32.totalorder %s29, 14
      %p73 = por %p71, %p72
      %p75 = scmp.ne.s32.totalorder %s58, %s74
      %p76 = scmp.eq.s32.totalorder %s29, 0
      %p77 = por %p75, %p76
      %s78 = ssub.s32 %s31, %s45
      %s79 = ssub.s32 %s32, %s41
      %s80 = sor.u32 %s78, %s79
      %p81 = scmp.eq.s32.totalorder %s80, 0
      %s83 = sadd.s32 %s82, 1
      %s84 = scalar_select %p81, %s82, %s83
      %p87 = pneg %p81
      %p88 = scmp.eq.s32.totalorder %s23, 14
      %p89 = por %p87, %p88
      %p90 = scmp.ne.s32.totalorder %s82, %s85
      %p91 = scmp.eq.s32.totalorder %s23, 0
      %p92 = por %p90, %p91
      %p93 = scmp.ne.s32.totalorder %s82, %s85
      %p94 = scmp.eq.s32.totalorder %s28, 14
      %p95 = por %p93, %p94
      %p96 = scmp.ne.s32.totalorder %s85, %s86
      %p97 = scmp.eq.s32.totalorder %s28, 0
      %p98 = por %p96, %p97
      %p99 = scmp.ne.s32.totalorder %s85, %s86
      %p100 = scmp.eq.s32.totalorder %s29, 14
      %p101 = por %p99, %p100
      %p103 = scmp.ne.s32.totalorder %s86, %s102
      %p104 = scmp.eq.s32.totalorder %s29, 0
      %p105 = por %p103, %p104
      %s106 = ssub.s32 %s31, %s45
      %s107 = ssub.s32 %s32, %s41
      %s108 = sor.u32 %s106, %s107
      %p109 = scmp.eq.s32.totalorder %s108, 0
      %s111 = sadd.s32 %s110, 1
      %s112 = scalar_select %p109, %s110, %s111
      %p115 = pneg %p109
      %p116 = scmp.eq.s32.totalorder %s23, 14
      %p117 = por %p115, %p116
      %p118 = scmp.ne.s32.totalorder %s110, %s113
      %p119 = scmp.eq.s32.totalorder %s23, 0
      %p120 = por %p118, %p119
      %p121 = scmp.ne.s32.totalorder %s110, %s113
      %p122 = scmp.eq.s32.totalorder %s28, 14
      %p123 = por %p121, %p122
      %p124 = scmp.ne.s32.totalorder %s113, %s114
      %p125 = scmp.eq.s32.totalorder %s28, 0
      %p126 = por %p124, %p125
      %p127 = scmp.ne.s32.totalorder %s113, %s114
      %p128 = scmp.eq.s32.totalorder %s29, 14
      %p129 = por %p127, %p128
      %p131 = scmp.ne.s32.totalorder %s114, %s130
      %p132 = scmp.eq.s32.totalorder %s29, 0
      %p133 = por %p131, %p132
      %s134 = ssub.s32 %s31, %s45
      %s135 = ssub.s32 %s32, %s41
      %s136 = sor.u32 %s134, %s135
      %p137 = scmp.eq.s32.totalorder %s136, 0
      %s139 = sadd.s32 %s138, 1
      %s140 = scalar_select %p137, %s138, %s139
      %p143 = pneg %p137
      %p144 = scmp.eq.s32.totalorder %s23, 14
      %p145 = por %p143, %p144
      %p146 = scmp.ne.s32.totalorder %s138, %s141
      %p147 = scmp.eq.s32.totalorder %s23, 0
      %p148 = por %p146, %p147
      %p149 = scmp.ne.s32.totalorder %s138, %s141
      %p150 = scmp.eq.s32.totalorder %s28, 14
      %p151 = por %p149, %p150
      %p152 = scmp.ne.s32.totalorder %s141, %s142
      %p153 = scmp.eq.s32.totalorder %s28, 0
      %p154 = por %p152, %p153
      %p155 = scmp.ne.s32.totalorder %s141, %s142
      %p156 = scmp.eq.s32.totalorder %s29, 14
      %p157 = por %p155, %p156
      %p159 = scmp.ne.s32.totalorder %s142, %s158
      %p160 = scmp.eq.s32.totalorder %s29, 0
      %p161 = por %p159, %p160
      %s162 = ssub.s32 %s31, %s45
      %p163 = scmp.eq.s32.totalorder %s162, 0
      %s165 = sadd.s32 %s164, 1
      %s166 = scalar_select %p163, %s164, %s165
      %p169 = pneg %p163
      %p170 = scmp.eq.s32.totalorder %s23, 14
      %p171 = por %p169, %p170
      %p172 = scmp.ne.s32.totalorder %s164, %s167
      %p173 = scmp.eq.s32.totalorder %s23, 0
      %p174 = por %p172, %p173
      %p175 = scmp.ne.s32.totalorder %s164, %s167
      %p176 = scmp.eq.s32.totalorder %s28, 14
      %p177 = por %p175, %p176
      %p178 = scmp.ne.s32.totalorder %s167, %s168
      %p179 = scmp.eq.s32.totalorder %s28, 0
      %p180 = por %p178, %p179
      %p181 = scmp.ne.s32.totalorder %s167, %s168
      %p182 = scmp.eq.s32.totalorder %s29, 14
      %p183 = por %p181, %p182
      %p185 = scmp.ne.s32.totalorder %s168, %s184
      %p186 = scmp.eq.s32.totalorder %s29, 0
      %p187 = por %p185, %p186
      %s188 = ssub.s32 %s30, %s49
      %s189 = ssub.s32 %s31, %s45
      %s190 = sor.u32 %s188, %s189
      %p191 = scmp.eq.s32.totalorder %s190, 0
      %s193 = sadd.s32 %s192, 1
      %s194 = scalar_select %p191, %s192, %s193
      %p197 = pneg %p191
      %p198 = scmp.eq.s32.totalorder %s23, 14
      %p199 = por %p197, %p198
      %p200 = scmp.ne.s32.totalorder %s192, %s195
      %p201 = scmp.eq.s32.totalorder %s23, 0
      %p202 = por %p200, %p201
      %p203 = scmp.ne.s32.totalorder %s192, %s195
      %p204 = scmp.eq.s32.totalorder %s28, 14
      %p205 = por %p203, %p204
      %p206 = scmp.ne.s32.totalorder %s195, %s196
      %p207 = scmp.eq.s32.totalorder %s28, 0
      %p208 = por %p206, %p207
      %p209 = scmp.ne.s32.totalorder %s195, %s196
      %p210 = scmp.eq.s32.totalorder %s29, 14
      %p211 = por %p209, %p210
      %p213 = scmp.ne.s32.totalorder %s196, %s212
      %p214 = scmp.eq.s32.totalorder %s29, 0
      %p215 = por %p213, %p214
      %p216 = scmp.le.s32.totalorder 1, %s23
      %p217 = scmp.lt.s32.totalorder %s23, 16
      %p218 = pnand %p216, %p217
      %p219 = pneg %p218
      // Predicated region
      $region9: #{tpu_custom_call.1} parent=5 // pred_check
        _
      $region10: #{tpu_custom_call.1} parent=5 // pred_check_branch
        %221 = sbr.rel (%p218) target = $region12
      $region11: #{tpu_custom_call.1} parent=5 // pred_region
        %s222 = ssub.s32 %s23, 1
      $region12: #{tpu_custom_call.1} parent=5 // pred_fallthru
        _
      %p223 = scmp.lt.s32.totalorder %s23, 15
      // Predicated region
      $region13: #{tpu_custom_call.1} parent=5 // pred_check
        %p224 = pneg %p223
      $region14: #{tpu_custom_call.1} parent=5 // pred_check_branch
        %226 = sbr.rel (%p224) target = $region16
      $region15: #{tpu_custom_call.1} parent=5 // pred_region
        // Predicated region
        $region17: #{tpu_custom_call.1} parent=15 // pred_check
          %p227 = pneg %p64
        $region18: #{tpu_custom_call.1} parent=15 // pred_check_branch
          %229 = sbr.rel (%p227) target = $region20
        $region19: #{tpu_custom_call.1} parent=15 // pred_region
          %s230 = sand.u32 %s54, 1
          %s231 = scalar_lea.sflag [#allocation4], %s230
          %s232 = sand.u32 %s54, 1
          %s233 = smul.addr %s232, 24
          %s234 = scalar_lea.vmem [#allocation3], %s233
          %s235 = smul.u32 3, %s30
          %s237 = ssub.s32 384, 384
          %238 = vsyncadd %s231, %s237
          %s239 = smul.addr %s235, 5
          %s240 = sadd.s32 %s32, %s239
          %s241 = smul.addr %s240, 128
          %s242 = scalar_lea.hbm %s0, %s241
          %s243 = sshll.u32 %s234, 4
          %s244 = int_to_ptr.vmem [resolvable:$true] %s243
          %249 = dma.hbm_to_vmem [thread:$0]  %s242, 384, %s244, %s231, 640, 128, 8
        $region20: #{tpu_custom_call.1} parent=15 // pred_fallthru
          _
        // Predicated region
        $region21: #{tpu_custom_call.1} parent=15 // pred_check
          %p250 = pneg %p92
        $region22: #{tpu_custom_call.1} parent=15 // pred_check_branch
          %252 = sbr.rel (%p250) target = $region24
        $region23: #{tpu_custom_call.1} parent=15 // pred_region
          %s253 = sand.u32 %s23, 1
          %s254 = scalar_lea.sflag [#allocation7], %s253
          %s255 = sand.u32 %s82, 1
          %s256 = smul.addr %s255, 128
          %s257 = scalar_lea.vmem [#allocation6], %s256
          %s258 = smul.u32 16, %s31
          %s260 = ssub.s32 2048, 2048
          %261 = vsyncadd %s254, %s260
          %s262 = smul.addr %s258, 5
          %s263 = sadd.s32 %s32, %s262
          %s264 = smul.addr %s263, 128
          %s265 = scalar_lea.hbm %s1, %s264
          %s266 = sshll.u32 %s257, 4
          %s267 = int_to_ptr.vmem [resolvable:$true] %s266
          %272 = dma.hbm_to_vmem [thread:$0]  %s265, 2048, %s267, %s254, 640, 128, 8
        $region24: #{tpu_custom_call.1} parent=15 // pred_fallthru
          _
        // Predicated region
        $region25: #{tpu_custom_call.1} parent=15 // pred_check
          %p273 = pneg %p120
        $region26: #{tpu_custom_call.1} parent=15 // pred_check_branch
          %275 = sbr.rel (%p273) target = $region28
        $region27: #{tpu_custom_call.1} parent=15 // pred_region
          %s276 = sand.u32 %s23, 1
          %s277 = scalar_lea.sflag [#allocation7], %s276
          %s278 = sand.u32 %s110, 1
          %s279 = smul.addr %s278, 128
          %s280 = scalar_lea.vmem [#allocation8], %s279
          %s281 = smul.u32 16, %s31
          %s283 = ssub.s32 2048, 2048
          %284 = vsyncadd %s277, %s283
          %s285 = smul.addr %s281, 5
          %s286 = sadd.s32 %s32, %s285
          %s287 = smul.addr %s286, 128
          %s288 = scalar_lea.hbm %s2, %s287
          %s289 = sshll.u32 %s280, 4
          %s290 = int_to_ptr.vmem [resolvable:$true] %s289
          %295 = dma.hbm_to_vmem [thread:$0]  %s288, 2048, %s290, %s277, 640, 128, 8
        $region28: #{tpu_custom_call.1} parent=15 // pred_fallthru
          _
        // Predicated region
        $region29: #{tpu_custom_call.1} parent=15 // pred_check
          %p296 = pneg %p148
        $region30: #{tpu_custom_call.1} parent=15 // pred_check_branch
          %298 = sbr.rel (%p296) target = $region32
        $region31: #{tpu_custom_call.1} parent=15 // pred_region
          %s299 = sand.u32 %s138, 1
          %s300 = scalar_lea.sflag [#allocation10], %s299
          %s301 = sand.u32 %s138, 1
          %s302 = smul.addr %s301, 128
          %s303 = scalar_lea.vmem [#allocation9], %s302
          %s304 = smul.u32 16, %s31
          %s306 = ssub.s32 2048, 2048
          %307 = vsyncadd %s300, %s306
          %s308 = smul.addr %s304, 5
          %s309 = sadd.s32 %s32, %s308
          %s310 = smul.addr %s309, 128
          %s311 = scalar_lea.hbm %s3, %s310
          %s312 = sshll.u32 %s303, 4
          %s313 = int_to_ptr.vmem [resolvable:$true] %s312
          %318 = dma.hbm_to_vmem [thread:$0]  %s311, 2048, %s313, %s300, 640, 128, 8
        $region32: #{tpu_custom_call.1} parent=15 // pred_fallthru
          _
        // Predicated region
        $region33: #{tpu_custom_call.1} parent=15 // pred_check
          %p319 = pneg %p174
        $region34: #{tpu_custom_call.1} parent=15 // pred_check_branch
          %321 = sbr.rel (%p319) target = $region36
        $region35: #{tpu_custom_call.1} parent=15 // pred_region
          %p322 = scmp.lt.s32.totalorder %s31, 2
          %s323 = scalar_select %p322, %s31, 2
          %s324 = scalar_lea.vmem %s4, %s323
        $region36: #{tpu_custom_call.1} parent=15 // pred_fallthru
          _
      $region16: #{tpu_custom_call.1} parent=5 // pred_fallthru
        _
      %p325 = scmp.le.s32.totalorder 1, %s23
      %p326 = scmp.lt.s32.totalorder %s23, 16
      %p327 = pnand %p325, %p326
      %p328 = pneg %p327
      // Predicated region
      $region37: #{tpu_custom_call.1} parent=5 // pred_check
        _
      $region38: #{tpu_custom_call.1} parent=5 // pred_check_branch
        %330 = sbr.rel (%p327) target = $region40
      $region39: #{tpu_custom_call.1} parent=5 // pred_region
        %s331 = ssub.s32 %s23, 1
        %s332 = sand.u32 %s57, 1
        %s333 = scalar_lea.sflag [#allocation4], %s332
        %s334 = sand.u32 %s57, 1
        %s335 = smul.addr %s334, 24
        %s336 = scalar_lea.vmem [#allocation3], %s335
        // Predicated region
        $region41: #{tpu_custom_call.1} parent=39 // pred_check
          %p337 = pneg %p70
        $region42: #{tpu_custom_call.1} parent=39 // pred_check_branch
          %339 = sbr.rel (%p337) target = $region44
        $region43: #{tpu_custom_call.1} parent=39 // pred_region
          %340 = dma.done %s333, 384
        $region44: #{tpu_custom_call.1} parent=39 // pred_fallthru
          _
        %s341 = sand.u32 %s28, 1
        %s342 = scalar_lea.sflag [#allocation7], %s341
        %s343 = sand.u32 %s85, 1
        %s344 = smul.addr %s343, 128
        %s345 = scalar_lea.vmem [#allocation6], %s344
        // Predicated region
        $region45: #{tpu_custom_call.1} parent=39 // pred_check
          %p346 = pneg %p98
        $region46: #{tpu_custom_call.1} parent=39 // pred_check_branch
          %348 = sbr.rel (%p346) target = $region48
        $region47: #{tpu_custom_call.1} parent=39 // pred_region
          %349 = dma.done %s342, 2048
        $region48: #{tpu_custom_call.1} parent=39 // pred_fallthru
          _
        %s350 = sand.u32 %s28, 1
        %s351 = scalar_lea.sflag [#allocation7], %s350
        %s352 = sand.u32 %s113, 1
        %s353 = smul.addr %s352, 128
        %s354 = scalar_lea.vmem [#allocation8], %s353
        // Predicated region
        $region49: #{tpu_custom_call.1} parent=39 // pred_check
          %p355 = pneg %p126
        $region50: #{tpu_custom_call.1} parent=39 // pred_check_branch
          %357 = sbr.rel (%p355) target = $region52
        $region51: #{tpu_custom_call.1} parent=39 // pred_region
          %358 = dma.done %s351, 2048
        $region52: #{tpu_custom_call.1} parent=39 // pred_fallthru
          _
        %s359 = sand.u32 %s141, 1
        %s360 = scalar_lea.sflag [#allocation10], %s359
        %s361 = sand.u32 %s141, 1
        %s362 = smul.addr %s361, 128
        %s363 = scalar_lea.vmem [#allocation9], %s362
        // Predicated region
        $region53: #{tpu_custom_call.1} parent=39 // pred_check
          %p364 = pneg %p154
        $region54: #{tpu_custom_call.1} parent=39 // pred_check_branch
          %366 = sbr.rel (%p364) target = $region56
        $region55: #{tpu_custom_call.1} parent=39 // pred_region
          %367 = dma.done %s360, 2048
        $region56: #{tpu_custom_call.1} parent=39 // pred_fallthru
          _
        %s368 = sand.u32 %s57, 1
        %s369 = scalar_lea.sflag [#allocation4], %s368
        %s370 = sand.u32 %s57, 1
        %s371 = smul.addr %s370, 24
        %s372 = scalar_lea.vmem [#allocation3], %s371
        %p373 = pneg %p70
        %p374 = pneg %p67
        %s375 = sand.u32 %s28, 1
        %s376 = scalar_lea.sflag [#allocation7], %s375
        %s377 = sand.u32 %s85, 1
        %s378 = smul.addr %s377, 128
        %s379 = scalar_lea.vmem [#allocation6], %s378
        %p380 = pneg %p98
        %p381 = pneg %p95
        %s382 = sand.u32 %s28, 1
        %s383 = scalar_lea.sflag [#allocation7], %s382
        %s384 = sand.u32 %s113, 1
        %s385 = smul.addr %s384, 128
        %s386 = scalar_lea.vmem [#allocation8], %s385
        %p387 = pneg %p126
        %p388 = pneg %p123
        %s389 = sand.u32 %s141, 1
        %s390 = scalar_lea.sflag [#allocation10], %s389
        %s391 = sand.u32 %s141, 1
        %s392 = smul.addr %s391, 128
        %s393 = scalar_lea.vmem [#allocation9], %s392
        %p394 = pneg %p154
        %p395 = pneg %p151
        %p396 = scmp.lt.s32.totalorder %s34, 2
        %s397 = scalar_select %p396, %s34, 2
        %s398 = scalar_lea.vmem %s4, %s397
        %p399 = pneg %p180
        %p400 = pneg %p177
        %p401 = pneg %p208
        %p402 = pneg %p205
        %s403 = sand.u32 %s195, 1
        %s404 = scalar_lea.sflag [#allocation5], %s403
        %s405 = sand.u32 %s195, 1
        %s406 = smul.addr %s405, 24
        %s407 = scalar_lea.vmem [#allocation11], %s406
        %s408 = smul.u32 3, %s33
        %s409 = smul.u32 16, %s34
        %s410 = smul.u32 16, %s34
        %s411 = smul.u32 16, %s34
        %p412 = scmp.lt.s32.totalorder %s34, 2
        %s413 = scalar_select %p412, %s34, 2
        %s414 = scalar_lea.vmem %s4, %s413
        %s415 = smul.u32 3, %s33
        %v416 = vld [vmem:[%s345] sm:$0xff]
        %v417 = vld [vmem:[%s345 + $0x8] sm:$0xff]
        %v418 = vld [vmem:[%s345 + $0x10] sm:$0xff]
        %v419 = vld [vmem:[%s345 + $0x18] sm:$0xff]
        %v420 = vld [vmem:[%s345 + $0x20] sm:$0xff]
        %v421 = vld [vmem:[%s345 + $0x28] sm:$0xff]
        %v422 = vld [vmem:[%s345 + $0x30] sm:$0xff]
        %v423 = vld [vmem:[%s345 + $0x38] sm:$0xff]
        %v424 = vld [vmem:[%s345 + $0x40] sm:$0xff]
        %v425 = vld [vmem:[%s345 + $0x48] sm:$0xff]
        %v426 = vld [vmem:[%s345 + $0x50] sm:$0xff]
        %v427 = vld [vmem:[%s345 + $0x58] sm:$0xff]
        %v428 = vld [vmem:[%s345 + $0x60] sm:$0xff]
        %v429 = vld [vmem:[%s345 + $0x68] sm:$0xff]
        %v430 = vld [vmem:[%s345 + $0x70] sm:$0xff]
        %v431 = vld [vmem:[%s345 + $0x78] sm:$0xff]
        %v432 = vld [vmem:[%s354] sm:$0xff]
        %v433 = vld [vmem:[%s354 + $0x8] sm:$0xff]
        %v434 = vld [vmem:[%s354 + $0x10] sm:$0xff]
        %v435 = vld [vmem:[%s354 + $0x18] sm:$0xff]
        %v436 = vld [vmem:[%s354 + $0x20] sm:$0xff]
        %v437 = vld [vmem:[%s354 + $0x28] sm:$0xff]
        %v438 = vld [vmem:[%s354 + $0x30] sm:$0xff]
        %v439 = vld [vmem:[%s354 + $0x38] sm:$0xff]
        %v440 = vld [vmem:[%s354 + $0x40] sm:$0xff]
        %v441 = vld [vmem:[%s354 + $0x48] sm:$0xff]
        %v442 = vld [vmem:[%s354 + $0x50] sm:$0xff]
        %v443 = vld [vmem:[%s354 + $0x58] sm:$0xff]
        %v444 = vld [vmem:[%s354 + $0x60] sm:$0xff]
        %v445 = vld [vmem:[%s354 + $0x68] sm:$0xff]
        %v446 = vld [vmem:[%s354 + $0x70] sm:$0xff]
        %v447 = vld [vmem:[%s354 + $0x78] sm:$0xff]
        %v448 = vld [vmem:[%s363] sm:$0xff]
        %v449 = vld [vmem:[%s363 + $0x8] sm:$0xff]
        %v450 = vld [vmem:[%s363 + $0x10] sm:$0xff]
        %v451 = vld [vmem:[%s363 + $0x18] sm:$0xff]
        %v452 = vld [vmem:[%s363 + $0x20] sm:$0xff]
        %v453 = vld [vmem:[%s363 + $0x28] sm:$0xff]
        %v454 = vld [vmem:[%s363 + $0x30] sm:$0xff]
        %v455 = vld [vmem:[%s363 + $0x38] sm:$0xff]
        %v456 = vld [vmem:[%s363 + $0x40] sm:$0xff]
        %v457 = vld [vmem:[%s363 + $0x48] sm:$0xff]
        %v458 = vld [vmem:[%s363 + $0x50] sm:$0xff]
        %v459 = vld [vmem:[%s363 + $0x58] sm:$0xff]
        %v460 = vld [vmem:[%s363 + $0x60] sm:$0xff]
        %v461 = vld [vmem:[%s363 + $0x68] sm:$0xff]
        %v462 = vld [vmem:[%s363 + $0x70] sm:$0xff]
        %v463 = vld [vmem:[%s363 + $0x78] sm:$0xff]
        %v464 = vmul.f32 %v432, %v448
        %v465 = vmul.f32 %v433, %v449
        %v466 = vmul.f32 %v434, %v450
        %v467 = vmul.f32 %v435, %v451
        %v468 = vmul.f32 %v436, %v452
        %v469 = vmul.f32 %v437, %v453
        %v470 = vmul.f32 %v438, %v454
        %v471 = vmul.f32 %v439, %v455
        %v472 = vmul.f32 %v440, %v456
        %v473 = vmul.f32 %v441, %v457
        %v474 = vmul.f32 %v442, %v458
        %v475 = vmul.f32 %v443, %v459
        %v476 = vmul.f32 %v444, %v460
        %v477 = vmul.f32 %v445, %v461
        %v478 = vmul.f32 %v446, %v462
        %v479 = vmul.f32 %v447, %v463
        %v480 = vadd.f32 %v416, %v464
        %v481 = vadd.f32 %v417, %v465
        %v482 = vadd.f32 %v418, %v466
        %v483 = vadd.f32 %v419, %v467
        %v484 = vadd.f32 %v420, %v468
        %v485 = vadd.f32 %v421, %v469
        %v486 = vadd.f32 %v422, %v470
        %v487 = vadd.f32 %v423, %v471
        %v488 = vadd.f32 %v424, %v472
        %v489 = vadd.f32 %v425, %v473
        %v490 = vadd.f32 %v426, %v474
        %v491 = vadd.f32 %v427, %v475
        %v492 = vadd.f32 %v428, %v476
        %v493 = vadd.f32 %v429, %v477
        %v494 = vadd.f32 %v430, %v478
        %v495 = vadd.f32 %v431, %v479
        %v496 = vld [vmem:[%s336] sm:$0xff]
        %v497 = vld [vmem:[%s336 + $0x8] sm:$0xff]
        %v498 = vld [vmem:[%s336 + $0x10] sm:$0xff]
        %499 = vmatprep.subr.mxu0 0.0
        %500 = vmatpush1.xpose.msra.mxu0 %v480
        %501 = vmatprep.subr.mxu0 0.0
        %502 = vmatpush1.xpose.msra.mxu0 %v481
        %503 = vmatprep.subr.mxu0 0.0
        %504 = vmatpush1.xpose.msra.mxu0 %v482
        %505 = vmatprep.subr.mxu0 0.0
        %506 = vmatpush1.xpose.msra.mxu0 %v483
        %507 = vmatprep.subr.mxu0 0.0
        %508 = vmatpush1.xpose.msra.mxu0 %v484
        %509 = vmatprep.subr.mxu0 0.0
        %510 = vmatpush1.xpose.msra.mxu0 %v485
        %511 = vmatprep.subr.mxu0 0.0
        %512 = vmatpush1.xpose.msra.mxu0 %v486
        %513 = vmatprep.subr.mxu0 0.0
        %514 = vmatpush1.xpose.msra.mxu0 %v487
        %515 = vmatprep.subr.mxu0 0.0
        %516 = vmatpush1.xpose.msra.mxu0 %v488
        %517 = vmatprep.subr.mxu0 0.0
        %518 = vmatpush1.xpose.msra.mxu0 %v489
        %519 = vmatprep.subr.mxu0 0.0
        %520 = vmatpush1.xpose.msra.mxu0 %v490
        %521 = vmatprep.subr.mxu0 0.0
        %522 = vmatpush1.xpose.msra.mxu0 %v491
        %523 = vmatprep.subr.mxu0 0.0
        %524 = vmatpush1.xpose.msra.mxu0 %v492
        %525 = vmatprep.subr.mxu0 0.0
        %526 = vmatpush1.xpose.msra.mxu0 %v493
        %527 = vmatprep.subr.mxu0 0.0
        %528 = vmatpush1.xpose.msra.mxu0 %v494
        %529 = vmatprep.subr.mxu0 0.0
        %530 = vmatpush1.xpose.msra.mxu0 %v495
        %531 = vmatprep.subr.mxu0 0.0
        %532 = vmatpush1.xpose.msra.mxu0 0.0
        %533 = vmatprep.subr.mxu0 0.0
        %534 = vmatpush1.xpose.msra.mxu0 0.0
        %535 = vmatprep.subr.mxu0 0.0
        %536 = vmatpush1.xpose.msra.mxu0 0.0
        %537 = vmatprep.subr.mxu0 0.0
        %538 = vmatpush1.xpose.msra.mxu0 0.0
        %539 = vmatprep.subr.mxu0 0.0
        %540 = vmatpush1.xpose.msra.mxu0 0.0
        %541 = vmatprep.subr.mxu0 0.0
        %542 = vmatpush1.xpose.msra.mxu0 0.0
        %543 = vmatprep.subr.mxu0 0.0
        %544 = vmatpush1.xpose.msra.mxu0 0.0
        %545 = vmatprep.subr.mxu0 0.0
        %546 = vmatpush1.xpose.msra.mxu0 0.0
        %547 = vmatprep.subr.mxu0 0.0
        %548 = vmatpush1.xpose.msra.mxu0 0.0
        %549 = vmatprep.subr.mxu0 0.0
        %550 = vmatpush1.xpose.msra.mxu0 0.0
        %551 = vmatprep.subr.mxu0 0.0
        %552 = vmatpush1.xpose.msra.mxu0 0.0
        %553 = vmatprep.subr.mxu0 0.0
        %554 = vmatpush1.xpose.msra.mxu0 0.0
        %555 = vmatprep.subr.mxu0 0.0
        %556 = vmatpush1.xpose.msra.mxu0 0.0
        %557 = vmatprep.subr.mxu0 0.0
        %558 = vmatpush1.xpose.msra.mxu0 0.0
        %559 = vmatprep.subr.mxu0 0.0
        %560 = vmatpush1.xpose.msra.mxu0 0.0
        %561 = vmatprep.subr.mxu0 0.0
        %562 = vmatpush1.xpose.msra.mxu0 0.0
        %563 = vmatprep.mubr.f32.mxu0 0.0
        %564 = vmatmul.mubr.f32.gmra.mrb[0].mxu0 %v496
        %v565 = vpop.f32.mrb[0].mxu0
        %v566 = vadd.f32 0.0, %v565
        %v567 = vpop.f32.mrb[0].mxu0
        %568 = vmatprep.mubr.f32.mxu0 0.0
        %569 = vmatmul.mubr.f32.gmra.mrb[0].mxu0 %v497
        %v570 = vpop.f32.mrb[0].mxu0
        %v571 = vadd.f32 0.0, %v570
        %v572 = vpop.f32.mrb[0].mxu0
        %573 = vmatprep.mubr.f32.mxu0 0.0
        %574 = vmatmul.mubr.f32.gmra.mrb[0].mxu0 %v498
        %v575 = vpop.f32.mrb[0].mxu0
        %v576 = vadd.f32 0.0, %v575
        %v577 = vpop.f32.mrb[0].mxu0
        %578 = vdwg.mxu0
        %p579 = scmp.eq.s32.totalorder %s35, 0
        // Predicated region
        $region57: #{tpu_custom_call.1} parent=39 // pred_check
          %p580 = pneg %p579
        $region58: #{tpu_custom_call.1} parent=39 // pred_check_branch
          %582 = sbr.rel (%p580) target = $region60
        $region59: #{tpu_custom_call.1} parent=39 // pred_region
          %583 = vst [vmem:[#allocation2] sm:$0xff] %v566
          %584 = vst [vmem:[#allocation2 + $0x8] sm:$0xff] %v571
          %585 = vst [vmem:[#allocation2 + $0x10] sm:$0xff] %v576
        $region60: #{tpu_custom_call.1} parent=39 // pred_fallthru
          _
        %p586 = scmp.gt.s32.totalorder %s35, 0
        // Predicated region
        $region61: #{tpu_custom_call.1} parent=39 // pred_check
          %p587 = pneg %p586
        $region62: #{tpu_custom_call.1} parent=39 // pred_check_branch
          %589 = sbr.rel (%p587) target = $region64
        $region63: #{tpu_custom_call.1} parent=39 // pred_region
          %v590 = vld [vmem:[#allocation2] sm:$0xff]
          %v591 = vld [vmem:[#allocation2 + $0x8] sm:$0xff]
          %v592 = vld [vmem:[#allocation2 + $0x10] sm:$0xff]
          %v593 = vadd.f32 %v590, %v566
          %v594 = vadd.f32 %v591, %v571
          %v595 = vadd.f32 %v592, %v576
          %596 = vst [vmem:[#allocation2] sm:$0xff] %v593
          %597 = vst [vmem:[#allocation2 + $0x8] sm:$0xff] %v594
          %598 = vst [vmem:[#allocation2 + $0x10] sm:$0xff] %v595
        $region64: #{tpu_custom_call.1} parent=39 // pred_fallthru
          _
        %p599 = scmp.eq.s32.totalorder %s35, 4
        // Predicated region
        $region65: #{tpu_custom_call.1} parent=39 // pred_check
          %p600 = pneg %p599
        $region66: #{tpu_custom_call.1} parent=39 // pred_check_branch
          %602 = sbr.rel (%p600) target = $region68
        $region67: #{tpu_custom_call.1} parent=39 // pred_region
          %v603 = vld [vmem:[#allocation2] sm:$0xff]
          %v604 = vld [vmem:[#allocation2 + $0x8] sm:$0xff]
          %v605 = vld [vmem:[#allocation2 + $0x10] sm:$0xff]
          %v606 = vld [vmem:[%s414] sm:$0x1]
          %v608 = vlaneseq
          %v609 = vshrl.u32 %v608, 7
          %v610 = vsub.s32 0, %v609
          %v611 = vrot.slane %v606, %v610
          %v613 = vadd.f32 %v603, %v611
          %v614 = vadd.f32 %v604, %v611
          %v615 = vadd.f32 %v605, %v611
          %616 = vst [vmem:[%s407] sm:$0xff] %v613
          %617 = vst [vmem:[%s407 + $0x8] sm:$0xff] %v614
          %618 = vst [vmem:[%s407 + $0x10] sm:$0xff] %v615
        $region68: #{tpu_custom_call.1} parent=39 // pred_fallthru
          _
        %s619 = sand.u32 %s195, 1
        %s620 = scalar_lea.sflag [#allocation5], %s619
        %s621 = sand.u32 %s195, 1
        %s622 = smul.addr %s621, 24
        %s623 = scalar_lea.vmem [#allocation11], %s622
        // Predicated region
        $region69: #{tpu_custom_call.1} parent=39 // pred_check
          %p624 = pneg %p205
        $region70: #{tpu_custom_call.1} parent=39 // pred_check_branch
          %626 = sbr.rel (%p624) target = $region72
        $region71: #{tpu_custom_call.1} parent=39 // pred_region
          %s627 = smul.u32 3, %s33
          %s629 = ssub.s32 384, 384
          %630 = vsyncadd %s620, %s629
          %s631 = smul.addr %s627, 3
          %s632 = sadd.s32 %s34, %s631
          %s633 = smul.addr %s632, 128
          %s634 = scalar_lea.hbm %s5, %s633
          %s635 = sshll.u32 %s623, 4
          %s636 = int_to_ptr.vmem [resolvable:$true] %s635
          %641 = dma.vmem_to_hbm [thread:$0]  %s636, 384, %s634, %s620, 128, 384, 8
        $region72: #{tpu_custom_call.1} parent=39 // pred_fallthru
          _
      $region40: #{tpu_custom_call.1} parent=5 // pred_fallthru
        _
      %p642 = scmp.le.s32.totalorder 2, %s23
      // Predicated region
      $region73: #{tpu_custom_call.1} parent=5 // pred_check
        %p643 = pneg %p642
      $region74: #{tpu_custom_call.1} parent=5 // pred_check_branch
        %645 = sbr.rel (%p643) target = $region76
      $region75: #{tpu_custom_call.1} parent=5 // pred_region
        %s646 = ssub.s32 %s23, 2
        // Predicated region
        $region77: #{tpu_custom_call.1} parent=75 // pred_check
          %p647 = pneg %p211
        $region78: #{tpu_custom_call.1} parent=75 // pred_check_branch
          %649 = sbr.rel (%p647) target = $region80
        $region79: #{tpu_custom_call.1} parent=75 // pred_region
          %s650 = sand.u32 %s196, 1
          %s651 = scalar_lea.sflag [#allocation5], %s650
          %s652 = sand.u32 %s196, 1
          %s653 = smul.addr %s652, 24
          %s654 = scalar_lea.vmem [#allocation11], %s653
          %655 = dma.done %s651, 384
        $region80: #{tpu_custom_call.1} parent=75 // pred_fallthru
          _
      $region76: #{tpu_custom_call.1} parent=5 // pred_fallthru
        _
    $region6: #{tpu_custom_call.1} parent=1 // loop_footer
      %s27 = sadd.s32 1, %s23
    $region7: #{tpu_custom_call.1} parent=1 // loop_footer_branch
      %22 = sbr.rel target = $region3
    $region8: #{tpu_custom_call.1} parent=1 // loop_exit
      _
    %656 = vsyncpa [#allocation4], 1
    %s657 = scalar_lea.sflag [#allocation4], 1
    %658 = vsyncpa %s657, 1
    %659 = vsyncpa [#allocation7], 1
    %s660 = scalar_lea.sflag [#allocation7], 1
    %661 = vsyncpa %s660, 1
    %662 = vsyncpa [#allocation10], 1
    %s663 = scalar_lea.sflag [#allocation10], 1
    %664 = vsyncpa %s663, 1
    %665 = vsyncpa [#allocation5], 1
    %s666 = scalar_lea.sflag [#allocation5], 1
    %667 = vsyncpa %s666, 1

</llo_original>
